<compile_context>
chip_gen: v7x
topology: tpu7x:2x2x1
jax: 0.10.0
libtpu: 0.0.40
codegen_flags: <defaults>
</compile_context>

<pallas_src>
import numpy as np
import jax
import jax.numpy as jnp
from jax.experimental import pallas as pl
from jax.experimental.pallas import tpu as pltpu


# ----------------------------- Pallas kernel --------------------------------
def gather_segment_mean_kernel(tok_ref, cnt_ref, emb_ref, out_ref):
    """One grid step = one group (= one batch element of one token stream).

    tok_ref : SMEM (G, S*L) int32    padded token ids          [scalar prefetch]
    cnt_ref : SMEM (G, S)   int32    tokens per segment (0 = pad segment)
    emb_ref : VMEM (V, 1, D) float32 vocab embedding table (resident block)
    out_ref : VMEM (1, S, D) float32 mean-pooled segment features for group g
    """
    g = pl.program_id(0)
    _, S, D = out_ref.shape
    L = tok_ref.shape[1] // S

    rows = []
    for s in range(S):                               # static unroll (S small)
        n = cnt_ref[g, s]
        inv = 1.0 / jnp.maximum(n, 1).astype(jnp.float32)
        acc = jnp.zeros((1, D), jnp.float32)
        for j in range(L):                           # static unroll, masked pads
            tid = tok_ref[g, s * L + j]
            w = jnp.where(j < n, 1.0, 0.0)           # 0.0 for padded token slots
            acc = acc + w * emb_ref[tid]             # dynamic row gather -> (1, D)
        rows.append(acc * inv)                       # n == 0 segment -> exactly 0
    out_ref[0] = jnp.concatenate(rows, axis=0).astype(out_ref.dtype)


@jax.jit
def pooled_segment_embed(tok_ids, seg_counts, emb3):
    """tok_ids (G,S*L) i32, seg_counts (G,S) i32, emb3 (V,1,D) f32 -> (G,S,D) f32."""
    G = tok_ids.shape[0]
    S = seg_counts.shape[1]
    V, _, D = emb3.shape
    grid_spec = pltpu.PrefetchScalarGridSpec(
        num_scalar_prefetch=2,            # token ids + segment counts -> SMEM
        grid=(G,),
        in_specs=[
            # Embedding table: constant block index -> DMA'd to VMEM once and
            # kept resident across the whole grid.
            pl.BlockSpec((V, 1, D), lambda g, tok, cnt: (0, 0, 0)),
        ],
        out_specs=pl.BlockSpec((1, S, D), lambda g, tok, cnt: (g, 0, 0)),
    )
    return pl.pallas_call(
        gather_segment_mean_kernel,
        out_shape=jax.ShapeDtypeStruct((G, S, D), emb3.dtype),
        grid_spec=grid_spec,
        compiler_params=pltpu.CompilerParams(
            dimension_semantics=("parallel",),  # groups shard across TCs on v7x
            vmem_limit_bytes=32 * 1024 * 1024),
    )(tok_ids, seg_counts, emb3)


# ------------------------------- host-side glue ------------------------------
def pack_segments(ids_per_batch, splits_per_batch, S, L):
    """Ragged token lists -> (B, S*L) int32 ids, (B, S) int32 counts, (B, S) pad mask."""
    B = len(ids_per_batch)
    tok = np.zeros((B, S, L), np.int32)
    cnt = np.zeros((B, S), np.int32)
    pad_mask = np.ones((B, S), np.bool_)
    for b, (ids, splits) in enumerate(zip(ids_per_batch, splits_per_batch)):
        ids = np.asarray(ids, np.int64)
        assert len(splits) <= S
        off = 0
        for s, n in enumerate(splits):
            assert 0 < n <= L
            tok[b, s, :n] = ids[off:off + n]
            cnt[b, s] = n
            pad_mask[b, s] = False
            off += n
    return tok.reshape(B, S * L), cnt, pad_mask


class AMRBART_VocabEmbedPallas:
    """Synthetic stand-in for the PyTorch module (shared vocab embedding + pooling)."""

    def __init__(self, vocab_size, hidden_dim, key):
        # xavier_uniform init, mirrors nn.init.xavier_uniform_ on the shared table
        bound = float(np.sqrt(6.0 / (vocab_size + hidden_dim)))
        self.embedding = jax.random.uniform(
            key, (vocab_size, hidden_dim), jnp.float32, -bound, bound)
        # Leading-dim-indexable layout for in-kernel dynamic row gathers.
        self._emb3 = self.embedding.reshape(vocab_size, 1, hidden_dim)
        self.text_dim = hidden_dim

    def forward(self, text_dict):
        S = text_dict["max_segments"]
        B = len(text_dict["amrs"])

        # Ragged Python lists -> small padded int arrays (O(total_tokens) host work,
        # no V-wide dense weights, no large H2D copies).
        L = max(max(max(sp) for sp in text_dict["text_token_splits"]),
                max(max(sp) for sp in text_dict["token_splits"]))
        tok_t, cnt_t, text_pad_masks = pack_segments(
            text_dict["text_token_ids"], text_dict["text_token_splits"], S, L)
        tok_a, cnt_a, _ = pack_segments(
            text_dict["token_ids"], text_dict["token_splits"], S, L)

        # Fold both streams + batch into one group axis -> single pallas_call.
        tok_all = jnp.asarray(np.concatenate([tok_t, tok_a], axis=0))   # (2B, S*L)
        cnt_all = jnp.asarray(np.concatenate([cnt_t, cnt_a], axis=0))   # (2B, S)

        pooled = pooled_segment_embed(tok_all, cnt_all, self._emb3)     # (2B, S, D)
        text_feats = pooled[:B]
        amr_feats = pooled[B:]

        # NOTE: reference asserts (seg_ids shape, pad rows exactly zero) are
        # validated in the test harness, not here, to avoid device->host syncs
        # on every forward.
        return {
            "amr": text_dict["amrs"],
            "amr_seg_ids": text_dict["seg_ids"],
            "amr_feats": amr_feats,
            "text_feats": text_feats,
            "text_pad_masks": jnp.asarray(text_pad_masks),
        }


# --------------------------------- main ---------------------------------------
if __name__ == "__main__":
    key = jax.random.PRNGKey(0)
    k_emb, k_txt, k_amr = jax.random.split(key, 3)

    VOCAB, DIM = 128, 32   # small synthetic vocab / hidden size
    PAD_LEN, MAX_SEG = 16, 8
    B = 2

    module = AMRBART_VocabEmbedPallas(VOCAB, DIM, k_emb)

    # text stream: batch0 has segments of lengths [3,2,4], batch1 [1,5]
    text_splits = [[3, 2, 4], [1, 5]]
    text_lens = [sum(s) for s in text_splits]
    text_ids_flat = np.asarray(
        jax.random.randint(k_txt, (sum(text_lens),), 1, VOCAB))
    text_ids = [text_ids_flat[:text_lens[0]], text_ids_flat[text_lens[0]:]]

    # amr stream: batch0 segments [2,2,3,1], batch1 [4,2]
    amr_splits = [[2, 2, 3, 1], [4, 2]]
    amr_lens = [sum(s) for s in amr_splits]
    amr_ids_flat = np.asarray(
        jax.random.randint(k_amr, (sum(amr_lens),), 1, VOCAB))
    amr_ids = [amr_ids_flat[:amr_lens[0]], amr_ids_flat[amr_lens[0]:]]

    seg_ids = np.zeros((B, MAX_SEG), np.int32)
    for b, s in enumerate(amr_splits):
        seg_ids[b, :len(s)] = 1

    text_dict = {
        "amrs": ["(a / amr-0)", "(b / amr-1)"],
        "text_token_ids": text_ids,
        "text_token_splits": text_splits,
        "token_ids": amr_ids,
        "token_splits": amr_splits,
        "seg_ids": jnp.asarray(seg_ids),
        "pad_len": PAD_LEN,
        "max_segments": MAX_SEG,
    }

    out = module.forward(text_dict)
    jax.block_until_ready(out["text_feats"])
    jax.block_until_ready(out["amr_feats"])

    # ---------------- correctness checks (test-only, off the hot path) --------
    def ref(ids_list, splits_list):
        rows = []
        for ids, splits in zip(ids_list, splits_list):
            feats = module.embedding[jnp.asarray(ids)]
            segs, off = [], 0
            for n in splits:
                segs.append(feats[off:off + n].mean(0))
                off += n
            seg = jnp.stack(segs, 0)
            pad = jnp.zeros((MAX_SEG - seg.shape[0], DIM), jnp.float32)
            rows.append(jnp.concatenate([seg, pad], 0))
        return jnp.stack(rows, 0)

    assert jnp.allclose(out["text_feats"], ref(text_ids, text_splits),
                        atol=1e-5, rtol=1e-5)
    assert jnp.allclose(out["amr_feats"], ref(amr_ids, amr_splits),
                        atol=1e-5, rtol=1e-5)

    # reference-module invariants, moved here from forward()
    assert out["amr_feats"].shape[1] == out["amr_seg_ids"].shape[1]
    pad_rows = np.asarray(out["amr_feats"]).reshape(-1, DIM)[
        np.asarray(out["amr_seg_ids"]).reshape(-1) == 0]
    assert float(np.abs(pad_rows).sum()) == 0.0

    print("KERNEL_OK")
</pallas_src>

<mosaic_0001>
module attributes {stable_mosaic.version = 11 : i64} {
  func.func @gather_segment_mean_kernel(%arg0: i32, %arg1: memref<4x40xi32, #tpu.memory_space<smem>>, %arg2: memref<4x8xi32, #tpu.memory_space<smem>>, %arg3: memref<128x1x32xf32, #tpu.memory_space<vmem>>, %arg4: memref<1x8x32xf32, #tpu.memory_space<vmem>>) attributes {dimension_semantics = [#tpu.dimension_semantics<parallel>], iteration_bounds = array<i64: 4>, scalar_prefetch = 2 : i64, scratch_operands = 0 : i64, tpu.core_type = #tpu.core_type<tc>, window_params = [{pipeline_mode = #tpu.pipeline_mode<synchronous>, transform_indices = @transform_0, window_bounds = array<i64: 128, 1, 32>}, {transform_indices = @transform_1, window_bounds = array<i64: 1, 8, 32>}]} {
    %0 = arith.index_cast %arg0 : i32 to index
    %c0 = arith.constant 0 : index
    %1 = memref.load %arg2[%0, %c0] : memref<4x8xi32, #tpu.memory_space<smem>>
    %c1_i32 = arith.constant 1 : i32
    %2 = arith.maxsi %1, %c1_i32 : i32
    %3 = arith.sitofp %2 : i32 to f32
    %cst = arith.constant 1.000000e+00 : f32
    %4 = arith.divf %cst, %3 : f32
    %cst_0 = arith.constant 0.000000e+00 : f32
    %5 = vector.broadcast %cst_0 : f32 to vector<1x32xf32>
    %6 = arith.index_cast %arg0 : i32 to index
    %c0_1 = arith.constant 0 : index
    %7 = memref.load %arg1[%6, %c0_1] : memref<4x40xi32, #tpu.memory_space<smem>>
    %c0_i32 = arith.constant 0 : i32
    %8 = arith.cmpi sgt, %1, %c0_i32 : i32
    %cst_2 = arith.constant 1.000000e+00 : f32
    %cst_3 = arith.constant 0.000000e+00 : f32
    %9 = arith.select %8, %cst_2, %cst_3 : f32
    %10 = arith.index_cast %7 : i32 to index
    %c0_4 = arith.constant 0 : index
    %c0_5 = arith.constant 0 : index
    %11 = vector.load %arg3[%10, %c0_4, %c0_5] : memref<128x1x32xf32, #tpu.memory_space<vmem>>, vector<1x1x32xf32>
    %12 = vector.shape_cast %11 : vector<1x1x32xf32> to vector<1x32xf32>
    %13 = vector.broadcast %9 : f32 to vector<1x32xf32>
    %14 = arith.mulf %13, %12 : vector<1x32xf32>
    %15 = arith.addf %5, %14 : vector<1x32xf32>
    %16 = arith.index_cast %arg0 : i32 to index
    %c1 = arith.constant 1 : index
    %17 = memref.load %arg1[%16, %c1] : memref<4x40xi32, #tpu.memory_space<smem>>
    %c1_i32_6 = arith.constant 1 : i32
    %18 = arith.cmpi sgt, %1, %c1_i32_6 : i32
    %cst_7 = arith.constant 1.000000e+00 : f32
    %cst_8 = arith.constant 0.000000e+00 : f32
    %19 = arith.select %18, %cst_7, %cst_8 : f32
    %20 = arith.index_cast %17 : i32 to index
    %c0_9 = arith.constant 0 : index
    %c0_10 = arith.constant 0 : index
    %21 = vector.load %arg3[%20, %c0_9, %c0_10] : memref<128x1x32xf32, #tpu.memory_space<vmem>>, vector<1x1x32xf32>
    %22 = vector.shape_cast %21 : vector<1x1x32xf32> to vector<1x32xf32>
    %23 = vector.broadcast %19 : f32 to vector<1x32xf32>
    %24 = arith.mulf %23, %22 : vector<1x32xf32>
    %25 = arith.addf %15, %24 : vector<1x32xf32>
    %26 = arith.index_cast %arg0 : i32 to index
    %c2 = arith.constant 2 : index
    %27 = memref.load %arg1[%26, %c2] : memref<4x40xi32, #tpu.memory_space<smem>>
    %c2_i32 = arith.constant 2 : i32
    %28 = arith.cmpi sgt, %1, %c2_i32 : i32
    %cst_11 = arith.constant 1.000000e+00 : f32
    %cst_12 = arith.constant 0.000000e+00 : f32
    %29 = arith.select %28, %cst_11, %cst_12 : f32
    %30 = arith.index_cast %27 : i32 to index
    %c0_13 = arith.constant 0 : index
    %c0_14 = arith.constant 0 : index
    %31 = vector.load %arg3[%30, %c0_13, %c0_14] : memref<128x1x32xf32, #tpu.memory_space<vmem>>, vector<1x1x32xf32>
    %32 = vector.shape_cast %31 : vector<1x1x32xf32> to vector<1x32xf32>
    %33 = vector.broadcast %29 : f32 to vector<1x32xf32>
    %34 = arith.mulf %33, %32 : vector<1x32xf32>
    %35 = arith.addf %25, %34 : vector<1x32xf32>
    %36 = arith.index_cast %arg0 : i32 to index
    %c3 = arith.constant 3 : index
    %37 = memref.load %arg1[%36, %c3] : memref<4x40xi32, #tpu.memory_space<smem>>
    %c3_i32 = arith.constant 3 : i32
    %38 = arith.cmpi sgt, %1, %c3_i32 : i32
    %cst_15 = arith.constant 1.000000e+00 : f32
    %cst_16 = arith.constant 0.000000e+00 : f32
    %39 = arith.select %38, %cst_15, %cst_16 : f32
    %40 = arith.index_cast %37 : i32 to index
    %c0_17 = arith.constant 0 : index
    %c0_18 = arith.constant 0 : index
    %41 = vector.load %arg3[%40, %c0_17, %c0_18] : memref<128x1x32xf32, #tpu.memory_space<vmem>>, vector<1x1x32xf32>
    %42 = vector.shape_cast %41 : vector<1x1x32xf32> to vector<1x32xf32>
    %43 = vector.broadcast %39 : f32 to vector<1x32xf32>
    %44 = arith.mulf %43, %42 : vector<1x32xf32>
    %45 = arith.addf %35, %44 : vector<1x32xf32>
    %46 = arith.index_cast %arg0 : i32 to index
    %c4 = arith.constant 4 : index
    %47 = memref.load %arg1[%46, %c4] : memref<4x40xi32, #tpu.memory_space<smem>>
    %c4_i32 = arith.constant 4 : i32
    %48 = arith.cmpi sgt, %1, %c4_i32 : i32
    %cst_19 = arith.constant 1.000000e+00 : f32
    %cst_20 = arith.constant 0.000000e+00 : f32
    %49 = arith.select %48, %cst_19, %cst_20 : f32
    %50 = arith.index_cast %47 : i32 to index
    %c0_21 = arith.constant 0 : index
    %c0_22 = arith.constant 0 : index
    %51 = vector.load %arg3[%50, %c0_21, %c0_22] : memref<128x1x32xf32, #tpu.memory_space<vmem>>, vector<1x1x32xf32>
    %52 = vector.shape_cast %51 : vector<1x1x32xf32> to vector<1x32xf32>
    %53 = vector.broadcast %49 : f32 to vector<1x32xf32>
    %54 = arith.mulf %53, %52 : vector<1x32xf32>
    %55 = arith.addf %45, %54 : vector<1x32xf32>
    %56 = vector.broadcast %4 : f32 to vector<1x32xf32>
    %57 = arith.mulf %55, %56 : vector<1x32xf32>
    %58 = arith.index_cast %arg0 : i32 to index
    %c1_23 = arith.constant 1 : index
    %59 = memref.load %arg2[%58, %c1_23] : memref<4x8xi32, #tpu.memory_space<smem>>
    %c1_i32_24 = arith.constant 1 : i32
    %60 = arith.maxsi %59, %c1_i32_24 : i32
    %61 = arith.sitofp %60 : i32 to f32
    %cst_25 = arith.constant 1.000000e+00 : f32
    %62 = arith.divf %cst_25, %61 : f32
    %cst_26 = arith.constant 0.000000e+00 : f32
    %63 = vector.broadcast %cst_26 : f32 to vector<1x32xf32>
    %64 = arith.index_cast %arg0 : i32 to index
    %c5 = arith.constant 5 : index
    %65 = memref.load %arg1[%64, %c5] : memref<4x40xi32, #tpu.memory_space<smem>>
    %c0_i32_27 = arith.constant 0 : i32
    %66 = arith.cmpi sgt, %59, %c0_i32_27 : i32
    %cst_28 = arith.constant 1.000000e+00 : f32
    %cst_29 = arith.constant 0.000000e+00 : f32
    %67 = arith.select %66, %cst_28, %cst_29 : f32
    %68 = arith.index_cast %65 : i32 to index
    %c0_30 = arith.constant 0 : index
    %c0_31 = arith.constant 0 : index
    %69 = vector.load %arg3[%68, %c0_30, %c0_31] : memref<128x1x32xf32, #tpu.memory_space<vmem>>, vector<1x1x32xf32>
    %70 = vector.shape_cast %69 : vector<1x1x32xf32> to vector<1x32xf32>
    %71 = vector.broadcast %67 : f32 to vector<1x32xf32>
    %72 = arith.mulf %71, %70 : vector<1x32xf32>
    %73 = arith.addf %63, %72 : vector<1x32xf32>
    %74 = arith.index_cast %arg0 : i32 to index
    %c6 = arith.constant 6 : index
    %75 = memref.load %arg1[%74, %c6] : memref<4x40xi32, #tpu.memory_space<smem>>
    %c1_i32_32 = arith.constant 1 : i32
    %76 = arith.cmpi sgt, %59, %c1_i32_32 : i32
    %cst_33 = arith.constant 1.000000e+00 : f32
    %cst_34 = arith.constant 0.000000e+00 : f32
    %77 = arith.select %76, %cst_33, %cst_34 : f32
    %78 = arith.index_cast %75 : i32 to index
    %c0_35 = arith.constant 0 : index
    %c0_36 = arith.constant 0 : index
    %79 = vector.load %arg3[%78, %c0_35, %c0_36] : memref<128x1x32xf32, #tpu.memory_space<vmem>>, vector<1x1x32xf32>
    %80 = vector.shape_cast %79 : vector<1x1x32xf32> to vector<1x32xf32>
    %81 = vector.broadcast %77 : f32 to vector<1x32xf32>
    %82 = arith.mulf %81, %80 : vector<1x32xf32>
    %83 = arith.addf %73, %82 : vector<1x32xf32>
    %84 = arith.index_cast %arg0 : i32 to index
    %c7 = arith.constant 7 : index
    %85 = memref.load %arg1[%84, %c7] : memref<4x40xi32, #tpu.memory_space<smem>>
    %c2_i32_37 = arith.constant 2 : i32
    %86 = arith.cmpi sgt, %59, %c2_i32_37 : i32
    %cst_38 = arith.constant 1.000000e+00 : f32
    %cst_39 = arith.constant 0.000000e+00 : f32
    %87 = arith.select %86, %cst_38, %cst_39 : f32
    %88 = arith.index_cast %85 : i32 to index
    %c0_40 = arith.constant 0 : index
    %c0_41 = arith.constant 0 : index
    %89 = vector.load %arg3[%88, %c0_40, %c0_41] : memref<128x1x32xf32, #tpu.memory_space<vmem>>, vector<1x1x32xf32>
    %90 = vector.shape_cast %89 : vector<1x1x32xf32> to vector<1x32xf32>
    %91 = vector.broadcast %87 : f32 to vector<1x32xf32>
    %92 = arith.mulf %91, %90 : vector<1x32xf32>
    %93 = arith.addf %83, %92 : vector<1x32xf32>
    %94 = arith.index_cast %arg0 : i32 to index
    %c8 = arith.constant 8 : index
    %95 = memref.load %arg1[%94, %c8] : memref<4x40xi32, #tpu.memory_space<smem>>
    %c3_i32_42 = arith.constant 3 : i32
    %96 = arith.cmpi sgt, %59, %c3_i32_42 : i32
    %cst_43 = arith.constant 1.000000e+00 : f32
    %cst_44 = arith.constant 0.000000e+00 : f32
    %97 = arith.select %96, %cst_43, %cst_44 : f32
    %98 = arith.index_cast %95 : i32 to index
    %c0_45 = arith.constant 0 : index
    %c0_46 = arith.constant 0 : index
    %99 = vector.load %arg3[%98, %c0_45, %c0_46] : memref<128x1x32xf32, #tpu.memory_space<vmem>>, vector<1x1x32xf32>
    %100 = vector.shape_cast %99 : vector<1x1x32xf32> to vector<1x32xf32>
    %101 = vector.broadcast %97 : f32 to vector<1x32xf32>
    %102 = arith.mulf %101, %100 : vector<1x32xf32>
    %103 = arith.addf %93, %102 : vector<1x32xf32>
    %104 = arith.index_cast %arg0 : i32 to index
    %c9 = arith.constant 9 : index
    %105 = memref.load %arg1[%104, %c9] : memref<4x40xi32, #tpu.memory_space<smem>>
    %c4_i32_47 = arith.constant 4 : i32
    %106 = arith.cmpi sgt, %59, %c4_i32_47 : i32
    %cst_48 = arith.constant 1.000000e+00 : f32
    %cst_49 = arith.constant 0.000000e+00 : f32
    %107 = arith.select %106, %cst_48, %cst_49 : f32
    %108 = arith.index_cast %105 : i32 to index
    %c0_50 = arith.constant 0 : index
    %c0_51 = arith.constant 0 : index
    %109 = vector.load %arg3[%108, %c0_50, %c0_51] : memref<128x1x32xf32, #tpu.memory_space<vmem>>, vector<1x1x32xf32>
    %110 = vector.shape_cast %109 : vector<1x1x32xf32> to vector<1x32xf32>
    %111 = vector.broadcast %107 : f32 to vector<1x32xf32>
    %112 = arith.mulf %111, %110 : vector<1x32xf32>
    %113 = arith.addf %103, %112 : vector<1x32xf32>
    %114 = vector.broadcast %62 : f32 to vector<1x32xf32>
    %115 = arith.mulf %113, %114 : vector<1x32xf32>
    %116 = arith.index_cast %arg0 : i32 to index
    %c2_52 = arith.constant 2 : index
    %117 = memref.load %arg2[%116, %c2_52] : memref<4x8xi32, #tpu.memory_space<smem>>
    %c1_i32_53 = arith.constant 1 : i32
    %118 = arith.maxsi %117, %c1_i32_53 : i32
    %119 = arith.sitofp %118 : i32 to f32
    %cst_54 = arith.constant 1.000000e+00 : f32
    %120 = arith.divf %cst_54, %119 : f32
    %cst_55 = arith.constant 0.000000e+00 : f32
    %121 = vector.broadcast %cst_55 : f32 to vector<1x32xf32>
    %122 = arith.index_cast %arg0 : i32 to index
    %c10 = arith.constant 10 : index
    %123 = memref.load %arg1[%122, %c10] : memref<4x40xi32, #tpu.memory_space<smem>>
    %c0_i32_56 = arith.constant 0 : i32
    %124 = arith.cmpi sgt, %117, %c0_i32_56 : i32
    %cst_57 = arith.constant 1.000000e+00 : f32
    %cst_58 = arith.constant 0.000000e+00 : f32
    %125 = arith.select %124, %cst_57, %cst_58 : f32
    %126 = arith.index_cast %123 : i32 to index
    %c0_59 = arith.constant 0 : index
    %c0_60 = arith.constant 0 : index
    %127 = vector.load %arg3[%126, %c0_59, %c0_60] : memref<128x1x32xf32, #tpu.memory_space<vmem>>, vector<1x1x32xf32>
    %128 = vector.shape_cast %127 : vector<1x1x32xf32> to vector<1x32xf32>
    %129 = vector.broadcast %125 : f32 to vector<1x32xf32>
    %130 = arith.mulf %129, %128 : vector<1x32xf32>
    %131 = arith.addf %121, %130 : vector<1x32xf32>
    %132 = arith.index_cast %arg0 : i32 to index
    %c11 = arith.constant 11 : index
    %133 = memref.load %arg1[%132, %c11] : memref<4x40xi32, #tpu.memory_space<smem>>
    %c1_i32_61 = arith.constant 1 : i32
    %134 = arith.cmpi sgt, %117, %c1_i32_61 : i32
    %cst_62 = arith.constant 1.000000e+00 : f32
    %cst_63 = arith.constant 0.000000e+00 : f32
    %135 = arith.select %134, %cst_62, %cst_63 : f32
    %136 = arith.index_cast %133 : i32 to index
    %c0_64 = arith.constant 0 : index
    %c0_65 = arith.constant 0 : index
    %137 = vector.load %arg3[%136, %c0_64, %c0_65] : memref<128x1x32xf32, #tpu.memory_space<vmem>>, vector<1x1x32xf32>
    %138 = vector.shape_cast %137 : vector<1x1x32xf32> to vector<1x32xf32>
    %139 = vector.broadcast %135 : f32 to vector<1x32xf32>
    %140 = arith.mulf %139, %138 : vector<1x32xf32>
    %141 = arith.addf %131, %140 : vector<1x32xf32>
    %142 = arith.index_cast %arg0 : i32 to index
    %c12 = arith.constant 12 : index
    %143 = memref.load %arg1[%142, %c12] : memref<4x40xi32, #tpu.memory_space<smem>>
    %c2_i32_66 = arith.constant 2 : i32
    %144 = arith.cmpi sgt, %117, %c2_i32_66 : i32
    %cst_67 = arith.constant 1.000000e+00 : f32
    %cst_68 = arith.constant 0.000000e+00 : f32
    %145 = arith.select %144, %cst_67, %cst_68 : f32
    %146 = arith.index_cast %143 : i32 to index
    %c0_69 = arith.constant 0 : index
    %c0_70 = arith.constant 0 : index
    %147 = vector.load %arg3[%146, %c0_69, %c0_70] : memref<128x1x32xf32, #tpu.memory_space<vmem>>, vector<1x1x32xf32>
    %148 = vector.shape_cast %147 : vector<1x1x32xf32> to vector<1x32xf32>
    %149 = vector.broadcast %145 : f32 to vector<1x32xf32>
    %150 = arith.mulf %149, %148 : vector<1x32xf32>
    %151 = arith.addf %141, %150 : vector<1x32xf32>
    %152 = arith.index_cast %arg0 : i32 to index
    %c13 = arith.constant 13 : index
    %153 = memref.load %arg1[%152, %c13] : memref<4x40xi32, #tpu.memory_space<smem>>
    %c3_i32_71 = arith.constant 3 : i32
    %154 = arith.cmpi sgt, %117, %c3_i32_71 : i32
    %cst_72 = arith.constant 1.000000e+00 : f32
    %cst_73 = arith.constant 0.000000e+00 : f32
    %155 = arith.select %154, %cst_72, %cst_73 : f32
    %156 = arith.index_cast %153 : i32 to index
    %c0_74 = arith.constant 0 : index
    %c0_75 = arith.constant 0 : index
    %157 = vector.load %arg3[%156, %c0_74, %c0_75] : memref<128x1x32xf32, #tpu.memory_space<vmem>>, vector<1x1x32xf32>
    %158 = vector.shape_cast %157 : vector<1x1x32xf32> to vector<1x32xf32>
    %159 = vector.broadcast %155 : f32 to vector<1x32xf32>
    %160 = arith.mulf %159, %158 : vector<1x32xf32>
    %161 = arith.addf %151, %160 : vector<1x32xf32>
    %162 = arith.index_cast %arg0 : i32 to index
    %c14 = arith.constant 14 : index
    %163 = memref.load %arg1[%162, %c14] : memref<4x40xi32, #tpu.memory_space<smem>>
    %c4_i32_76 = arith.constant 4 : i32
    %164 = arith.cmpi sgt, %117, %c4_i32_76 : i32
    %cst_77 = arith.constant 1.000000e+00 : f32
    %cst_78 = arith.constant 0.000000e+00 : f32
    %165 = arith.select %164, %cst_77, %cst_78 : f32
    %166 = arith.index_cast %163 : i32 to index
    %c0_79 = arith.constant 0 : index
    %c0_80 = arith.constant 0 : index
    %167 = vector.load %arg3[%166, %c0_79, %c0_80] : memref<128x1x32xf32, #tpu.memory_space<vmem>>, vector<1x1x32xf32>
    %168 = vector.shape_cast %167 : vector<1x1x32xf32> to vector<1x32xf32>
    %169 = vector.broadcast %165 : f32 to vector<1x32xf32>
    %170 = arith.mulf %169, %168 : vector<1x32xf32>
    %171 = arith.addf %161, %170 : vector<1x32xf32>
    %172 = vector.broadcast %120 : f32 to vector<1x32xf32>
    %173 = arith.mulf %171, %172 : vector<1x32xf32>
    %174 = arith.index_cast %arg0 : i32 to index
    %c3_81 = arith.constant 3 : index
    %175 = memref.load %arg2[%174, %c3_81] : memref<4x8xi32, #tpu.memory_space<smem>>
    %c1_i32_82 = arith.constant 1 : i32
    %176 = arith.maxsi %175, %c1_i32_82 : i32
    %177 = arith.sitofp %176 : i32 to f32
    %cst_83 = arith.constant 1.000000e+00 : f32
    %178 = arith.divf %cst_83, %177 : f32
    %cst_84 = arith.constant 0.000000e+00 : f32
    %179 = vector.broadcast %cst_84 : f32 to vector<1x32xf32>
    %180 = arith.index_cast %arg0 : i32 to index
    %c15 = arith.constant 15 : index
    %181 = memref.load %arg1[%180, %c15] : memref<4x40xi32, #tpu.memory_space<smem>>
    %c0_i32_85 = arith.constant 0 : i32
    %182 = arith.cmpi sgt, %175, %c0_i32_85 : i32
    %cst_86 = arith.constant 1.000000e+00 : f32
    %cst_87 = arith.constant 0.000000e+00 : f32
    %183 = arith.select %182, %cst_86, %cst_87 : f32
    %184 = arith.index_cast %181 : i32 to index
    %c0_88 = arith.constant 0 : index
    %c0_89 = arith.constant 0 : index
    %185 = vector.load %arg3[%184, %c0_88, %c0_89] : memref<128x1x32xf32, #tpu.memory_space<vmem>>, vector<1x1x32xf32>
    %186 = vector.shape_cast %185 : vector<1x1x32xf32> to vector<1x32xf32>
    %187 = vector.broadcast %183 : f32 to vector<1x32xf32>
    %188 = arith.mulf %187, %186 : vector<1x32xf32>
    %189 = arith.addf %179, %188 : vector<1x32xf32>
    %190 = arith.index_cast %arg0 : i32 to index
    %c16 = arith.constant 16 : index
    %191 = memref.load %arg1[%190, %c16] : memref<4x40xi32, #tpu.memory_space<smem>>
    %c1_i32_90 = arith.constant 1 : i32
    %192 = arith.cmpi sgt, %175, %c1_i32_90 : i32
    %cst_91 = arith.constant 1.000000e+00 : f32
    %cst_92 = arith.constant 0.000000e+00 : f32
    %193 = arith.select %192, %cst_91, %cst_92 : f32
    %194 = arith.index_cast %191 : i32 to index
    %c0_93 = arith.constant 0 : index
    %c0_94 = arith.constant 0 : index
    %195 = vector.load %arg3[%194, %c0_93, %c0_94] : memref<128x1x32xf32, #tpu.memory_space<vmem>>, vector<1x1x32xf32>
    %196 = vector.shape_cast %195 : vector<1x1x32xf32> to vector<1x32xf32>
    %197 = vector.broadcast %193 : f32 to vector<1x32xf32>
    %198 = arith.mulf %197, %196 : vector<1x32xf32>
    %199 = arith.addf %189, %198 : vector<1x32xf32>
    %200 = arith.index_cast %arg0 : i32 to index
    %c17 = arith.constant 17 : index
    %201 = memref.load %arg1[%200, %c17] : memref<4x40xi32, #tpu.memory_space<smem>>
    %c2_i32_95 = arith.constant 2 : i32
    %202 = arith.cmpi sgt, %175, %c2_i32_95 : i32
    %cst_96 = arith.constant 1.000000e+00 : f32
    %cst_97 = arith.constant 0.000000e+00 : f32
    %203 = arith.select %202, %cst_96, %cst_97 : f32
    %204 = arith.index_cast %201 : i32 to index
    %c0_98 = arith.constant 0 : index
    %c0_99 = arith.constant 0 : index
    %205 = vector.load %arg3[%204, %c0_98, %c0_99] : memref<128x1x32xf32, #tpu.memory_space<vmem>>, vector<1x1x32xf32>
    %206 = vector.shape_cast %205 : vector<1x1x32xf32> to vector<1x32xf32>
    %207 = vector.broadcast %203 : f32 to vector<1x32xf32>
    %208 = arith.mulf %207, %206 : vector<1x32xf32>
    %209 = arith.addf %199, %208 : vector<1x32xf32>
    %210 = arith.index_cast %arg0 : i32 to index
    %c18 = arith.constant 18 : index
    %211 = memref.load %arg1[%210, %c18] : memref<4x40xi32, #tpu.memory_space<smem>>
    %c3_i32_100 = arith.constant 3 : i32
    %212 = arith.cmpi sgt, %175, %c3_i32_100 : i32
    %cst_101 = arith.constant 1.000000e+00 : f32
    %cst_102 = arith.constant 0.000000e+00 : f32
    %213 = arith.select %212, %cst_101, %cst_102 : f32
    %214 = arith.index_cast %211 : i32 to index
    %c0_103 = arith.constant 0 : index
    %c0_104 = arith.constant 0 : index
    %215 = vector.load %arg3[%214, %c0_103, %c0_104] : memref<128x1x32xf32, #tpu.memory_space<vmem>>, vector<1x1x32xf32>
    %216 = vector.shape_cast %215 : vector<1x1x32xf32> to vector<1x32xf32>
    %217 = vector.broadcast %213 : f32 to vector<1x32xf32>
    %218 = arith.mulf %217, %216 : vector<1x32xf32>
    %219 = arith.addf %209, %218 : vector<1x32xf32>
    %220 = arith.index_cast %arg0 : i32 to index
    %c19 = arith.constant 19 : index
    %221 = memref.load %arg1[%220, %c19] : memref<4x40xi32, #tpu.memory_space<smem>>
    %c4_i32_105 = arith.constant 4 : i32
    %222 = arith.cmpi sgt, %175, %c4_i32_105 : i32
    %cst_106 = arith.constant 1.000000e+00 : f32
    %cst_107 = arith.constant 0.000000e+00 : f32
    %223 = arith.select %222, %cst_106, %cst_107 : f32
    %224 = arith.index_cast %221 : i32 to index
    %c0_108 = arith.constant 0 : index
    %c0_109 = arith.constant 0 : index
    %225 = vector.load %arg3[%224, %c0_108, %c0_109] : memref<128x1x32xf32, #tpu.memory_space<vmem>>, vector<1x1x32xf32>
    %226 = vector.shape_cast %225 : vector<1x1x32xf32> to vector<1x32xf32>
    %227 = vector.broadcast %223 : f32 to vector<1x32xf32>
    %228 = arith.mulf %227, %226 : vector<1x32xf32>
    %229 = arith.addf %219, %228 : vector<1x32xf32>
    %230 = vector.broadcast %178 : f32 to vector<1x32xf32>
    %231 = arith.mulf %229, %230 : vector<1x32xf32>
    %232 = arith.index_cast %arg0 : i32 to index
    %c4_110 = arith.constant 4 : index
    %233 = memref.load %arg2[%232, %c4_110] : memref<4x8xi32, #tpu.memory_space<smem>>
    %c1_i32_111 = arith.constant 1 : i32
    %234 = arith.maxsi %233, %c1_i32_111 : i32
    %235 = arith.sitofp %234 : i32 to f32
    %cst_112 = arith.constant 1.000000e+00 : f32
    %236 = arith.divf %cst_112, %235 : f32
    %cst_113 = arith.constant 0.000000e+00 : f32
    %237 = vector.broadcast %cst_113 : f32 to vector<1x32xf32>
    %238 = arith.index_cast %arg0 : i32 to index
    %c20 = arith.constant 20 : index
    %239 = memref.load %arg1[%238, %c20] : memref<4x40xi32, #tpu.memory_space<smem>>
    %c0_i32_114 = arith.constant 0 : i32
    %240 = arith.cmpi sgt, %233, %c0_i32_114 : i32
    %cst_115 = arith.constant 1.000000e+00 : f32
    %cst_116 = arith.constant 0.000000e+00 : f32
    %241 = arith.select %240, %cst_115, %cst_116 : f32
    %242 = arith.index_cast %239 : i32 to index
    %c0_117 = arith.constant 0 : index
    %c0_118 = arith.constant 0 : index
    %243 = vector.load %arg3[%242, %c0_117, %c0_118] : memref<128x1x32xf32, #tpu.memory_space<vmem>>, vector<1x1x32xf32>
    %244 = vector.shape_cast %243 : vector<1x1x32xf32> to vector<1x32xf32>
    %245 = vector.broadcast %241 : f32 to vector<1x32xf32>
    %246 = arith.mulf %245, %244 : vector<1x32xf32>
    %247 = arith.addf %237, %246 : vector<1x32xf32>
    %248 = arith.index_cast %arg0 : i32 to index
    %c21 = arith.constant 21 : index
    %249 = memref.load %arg1[%248, %c21] : memref<4x40xi32, #tpu.memory_space<smem>>
    %c1_i32_119 = arith.constant 1 : i32
    %250 = arith.cmpi sgt, %233, %c1_i32_119 : i32
    %cst_120 = arith.constant 1.000000e+00 : f32
    %cst_121 = arith.constant 0.000000e+00 : f32
    %251 = arith.select %250, %cst_120, %cst_121 : f32
    %252 = arith.index_cast %249 : i32 to index
    %c0_122 = arith.constant 0 : index
    %c0_123 = arith.constant 0 : index
    %253 = vector.load %arg3[%252, %c0_122, %c0_123] : memref<128x1x32xf32, #tpu.memory_space<vmem>>, vector<1x1x32xf32>
    %254 = vector.shape_cast %253 : vector<1x1x32xf32> to vector<1x32xf32>
    %255 = vector.broadcast %251 : f32 to vector<1x32xf32>
    %256 = arith.mulf %255, %254 : vector<1x32xf32>
    %257 = arith.addf %247, %256 : vector<1x32xf32>
    %258 = arith.index_cast %arg0 : i32 to index
    %c22 = arith.constant 22 : index
    %259 = memref.load %arg1[%258, %c22] : memref<4x40xi32, #tpu.memory_space<smem>>
    %c2_i32_124 = arith.constant 2 : i32
    %260 = arith.cmpi sgt, %233, %c2_i32_124 : i32
    %cst_125 = arith.constant 1.000000e+00 : f32
    %cst_126 = arith.constant 0.000000e+00 : f32
    %261 = arith.select %260, %cst_125, %cst_126 : f32
    %262 = arith.index_cast %259 : i32 to index
    %c0_127 = arith.constant 0 : index
    %c0_128 = arith.constant 0 : index
    %263 = vector.load %arg3[%262, %c0_127, %c0_128] : memref<128x1x32xf32, #tpu.memory_space<vmem>>, vector<1x1x32xf32>
    %264 = vector.shape_cast %263 : vector<1x1x32xf32> to vector<1x32xf32>
    %265 = vector.broadcast %261 : f32 to vector<1x32xf32>
    %266 = arith.mulf %265, %264 : vector<1x32xf32>
    %267 = arith.addf %257, %266 : vector<1x32xf32>
    %268 = arith.index_cast %arg0 : i32 to index
    %c23 = arith.constant 23 : index
    %269 = memref.load %arg1[%268, %c23] : memref<4x40xi32, #tpu.memory_space<smem>>
    %c3_i32_129 = arith.constant 3 : i32
    %270 = arith.cmpi sgt, %233, %c3_i32_129 : i32
    %cst_130 = arith.constant 1.000000e+00 : f32
    %cst_131 = arith.constant 0.000000e+00 : f32
    %271 = arith.select %270, %cst_130, %cst_131 : f32
    %272 = arith.index_cast %269 : i32 to index
    %c0_132 = arith.constant 0 : index
    %c0_133 = arith.constant 0 : index
    %273 = vector.load %arg3[%272, %c0_132, %c0_133] : memref<128x1x32xf32, #tpu.memory_space<vmem>>, vector<1x1x32xf32>
    %274 = vector.shape_cast %273 : vector<1x1x32xf32> to vector<1x32xf32>
    %275 = vector.broadcast %271 : f32 to vector<1x32xf32>
    %276 = arith.mulf %275, %274 : vector<1x32xf32>
    %277 = arith.addf %267, %276 : vector<1x32xf32>
    %278 = arith.index_cast %arg0 : i32 to index
    %c24 = arith.constant 24 : index
    %279 = memref.load %arg1[%278, %c24] : memref<4x40xi32, #tpu.memory_space<smem>>
    %c4_i32_134 = arith.constant 4 : i32
    %280 = arith.cmpi sgt, %233, %c4_i32_134 : i32
    %cst_135 = arith.constant 1.000000e+00 : f32
    %cst_136 = arith.constant 0.000000e+00 : f32
    %281 = arith.select %280, %cst_135, %cst_136 : f32
    %282 = arith.index_cast %279 : i32 to index
    %c0_137 = arith.constant 0 : index
    %c0_138 = arith.constant 0 : index
    %283 = vector.load %arg3[%282, %c0_137, %c0_138] : memref<128x1x32xf32, #tpu.memory_space<vmem>>, vector<1x1x32xf32>
    %284 = vector.shape_cast %283 : vector<1x1x32xf32> to vector<1x32xf32>
    %285 = vector.broadcast %281 : f32 to vector<1x32xf32>
    %286 = arith.mulf %285, %284 : vector<1x32xf32>
    %287 = arith.addf %277, %286 : vector<1x32xf32>
    %288 = vector.broadcast %236 : f32 to vector<1x32xf32>
    %289 = arith.mulf %287, %288 : vector<1x32xf32>
    %290 = arith.index_cast %arg0 : i32 to index
    %c5_139 = arith.constant 5 : index
    %291 = memref.load %arg2[%290, %c5_139] : memref<4x8xi32, #tpu.memory_space<smem>>
    %c1_i32_140 = arith.constant 1 : i32
    %292 = arith.maxsi %291, %c1_i32_140 : i32
    %293 = arith.sitofp %292 : i32 to f32
    %cst_141 = arith.constant 1.000000e+00 : f32
    %294 = arith.divf %cst_141, %293 : f32
    %cst_142 = arith.constant 0.000000e+00 : f32
    %295 = vector.broadcast %cst_142 : f32 to vector<1x32xf32>
    %296 = arith.index_cast %arg0 : i32 to index
    %c25 = arith.constant 25 : index
    %297 = memref.load %arg1[%296, %c25] : memref<4x40xi32, #tpu.memory_space<smem>>
    %c0_i32_143 = arith.constant 0 : i32
    %298 = arith.cmpi sgt, %291, %c0_i32_143 : i32
    %cst_144 = arith.constant 1.000000e+00 : f32
    %cst_145 = arith.constant 0.000000e+00 : f32
    %299 = arith.select %298, %cst_144, %cst_145 : f32
    %300 = arith.index_cast %297 : i32 to index
    %c0_146 = arith.constant 0 : index
    %c0_147 = arith.constant 0 : index
    %301 = vector.load %arg3[%300, %c0_146, %c0_147] : memref<128x1x32xf32, #tpu.memory_space<vmem>>, vector<1x1x32xf32>
    %302 = vector.shape_cast %301 : vector<1x1x32xf32> to vector<1x32xf32>
    %303 = vector.broadcast %299 : f32 to vector<1x32xf32>
    %304 = arith.mulf %303, %302 : vector<1x32xf32>
    %305 = arith.addf %295, %304 : vector<1x32xf32>
    %306 = arith.index_cast %arg0 : i32 to index
    %c26 = arith.constant 26 : index
    %307 = memref.load %arg1[%306, %c26] : memref<4x40xi32, #tpu.memory_space<smem>>
    %c1_i32_148 = arith.constant 1 : i32
    %308 = arith.cmpi sgt, %291, %c1_i32_148 : i32
    %cst_149 = arith.constant 1.000000e+00 : f32
    %cst_150 = arith.constant 0.000000e+00 : f32
    %309 = arith.select %308, %cst_149, %cst_150 : f32
    %310 = arith.index_cast %307 : i32 to index
    %c0_151 = arith.constant 0 : index
    %c0_152 = arith.constant 0 : index
    %311 = vector.load %arg3[%310, %c0_151, %c0_152] : memref<128x1x32xf32, #tpu.memory_space<vmem>>, vector<1x1x32xf32>
    %312 = vector.shape_cast %311 : vector<1x1x32xf32> to vector<1x32xf32>
    %313 = vector.broadcast %309 : f32 to vector<1x32xf32>
    %314 = arith.mulf %313, %312 : vector<1x32xf32>
    %315 = arith.addf %305, %314 : vector<1x32xf32>
    %316 = arith.index_cast %arg0 : i32 to index
    %c27 = arith.constant 27 : index
    %317 = memref.load %arg1[%316, %c27] : memref<4x40xi32, #tpu.memory_space<smem>>
    %c2_i32_153 = arith.constant 2 : i32
    %318 = arith.cmpi sgt, %291, %c2_i32_153 : i32
    %cst_154 = arith.constant 1.000000e+00 : f32
    %cst_155 = arith.constant 0.000000e+00 : f32
    %319 = arith.select %318, %cst_154, %cst_155 : f32
    %320 = arith.index_cast %317 : i32 to index
    %c0_156 = arith.constant 0 : index
    %c0_157 = arith.constant 0 : index
    %321 = vector.load %arg3[%320, %c0_156, %c0_157] : memref<128x1x32xf32, #tpu.memory_space<vmem>>, vector<1x1x32xf32>
    %322 = vector.shape_cast %321 : vector<1x1x32xf32> to vector<1x32xf32>
    %323 = vector.broadcast %319 : f32 to vector<1x32xf32>
    %324 = arith.mulf %323, %322 : vector<1x32xf32>
    %325 = arith.addf %315, %324 : vector<1x32xf32>
    %326 = arith.index_cast %arg0 : i32 to index
    %c28 = arith.constant 28 : index
    %327 = memref.load %arg1[%326, %c28] : memref<4x40xi32, #tpu.memory_space<smem>>
    %c3_i32_158 = arith.constant 3 : i32
    %328 = arith.cmpi sgt, %291, %c3_i32_158 : i32
    %cst_159 = arith.constant 1.000000e+00 : f32
    %cst_160 = arith.constant 0.000000e+00 : f32
    %329 = arith.select %328, %cst_159, %cst_160 : f32
    %330 = arith.index_cast %327 : i32 to index
    %c0_161 = arith.constant 0 : index
    %c0_162 = arith.constant 0 : index
    %331 = vector.load %arg3[%330, %c0_161, %c0_162] : memref<128x1x32xf32, #tpu.memory_space<vmem>>, vector<1x1x32xf32>
    %332 = vector.shape_cast %331 : vector<1x1x32xf32> to vector<1x32xf32>
    %333 = vector.broadcast %329 : f32 to vector<1x32xf32>
    %334 = arith.mulf %333, %332 : vector<1x32xf32>
    %335 = arith.addf %325, %334 : vector<1x32xf32>
    %336 = arith.index_cast %arg0 : i32 to index
    %c29 = arith.constant 29 : index
    %337 = memref.load %arg1[%336, %c29] : memref<4x40xi32, #tpu.memory_space<smem>>
    %c4_i32_163 = arith.constant 4 : i32
    %338 = arith.cmpi sgt, %291, %c4_i32_163 : i32
    %cst_164 = arith.constant 1.000000e+00 : f32
    %cst_165 = arith.constant 0.000000e+00 : f32
    %339 = arith.select %338, %cst_164, %cst_165 : f32
    %340 = arith.index_cast %337 : i32 to index
    %c0_166 = arith.constant 0 : index
    %c0_167 = arith.constant 0 : index
    %341 = vector.load %arg3[%340, %c0_166, %c0_167] : memref<128x1x32xf32, #tpu.memory_space<vmem>>, vector<1x1x32xf32>
    %342 = vector.shape_cast %341 : vector<1x1x32xf32> to vector<1x32xf32>
    %343 = vector.broadcast %339 : f32 to vector<1x32xf32>
    %344 = arith.mulf %343, %342 : vector<1x32xf32>
    %345 = arith.addf %335, %344 : vector<1x32xf32>
    %346 = vector.broadcast %294 : f32 to vector<1x32xf32>
    %347 = arith.mulf %345, %346 : vector<1x32xf32>
    %348 = arith.index_cast %arg0 : i32 to index
    %c6_168 = arith.constant 6 : index
    %349 = memref.load %arg2[%348, %c6_168] : memref<4x8xi32, #tpu.memory_space<smem>>
    %c1_i32_169 = arith.constant 1 : i32
    %350 = arith.maxsi %349, %c1_i32_169 : i32
    %351 = arith.sitofp %350 : i32 to f32
    %cst_170 = arith.constant 1.000000e+00 : f32
    %352 = arith.divf %cst_170, %351 : f32
    %cst_171 = arith.constant 0.000000e+00 : f32
    %353 = vector.broadcast %cst_171 : f32 to vector<1x32xf32>
    %354 = arith.index_cast %arg0 : i32 to index
    %c30 = arith.constant 30 : index
    %355 = memref.load %arg1[%354, %c30] : memref<4x40xi32, #tpu.memory_space<smem>>
    %c0_i32_172 = arith.constant 0 : i32
    %356 = arith.cmpi sgt, %349, %c0_i32_172 : i32
    %cst_173 = arith.constant 1.000000e+00 : f32
    %cst_174 = arith.constant 0.000000e+00 : f32
    %357 = arith.select %356, %cst_173, %cst_174 : f32
    %358 = arith.index_cast %355 : i32 to index
    %c0_175 = arith.constant 0 : index
    %c0_176 = arith.constant 0 : index
    %359 = vector.load %arg3[%358, %c0_175, %c0_176] : memref<128x1x32xf32, #tpu.memory_space<vmem>>, vector<1x1x32xf32>
    %360 = vector.shape_cast %359 : vector<1x1x32xf32> to vector<1x32xf32>
    %361 = vector.broadcast %357 : f32 to vector<1x32xf32>
    %362 = arith.mulf %361, %360 : vector<1x32xf32>
    %363 = arith.addf %353, %362 : vector<1x32xf32>
    %364 = arith.index_cast %arg0 : i32 to index
    %c31 = arith.constant 31 : index
    %365 = memref.load %arg1[%364, %c31] : memref<4x40xi32, #tpu.memory_space<smem>>
    %c1_i32_177 = arith.constant 1 : i32
    %366 = arith.cmpi sgt, %349, %c1_i32_177 : i32
    %cst_178 = arith.constant 1.000000e+00 : f32
    %cst_179 = arith.constant 0.000000e+00 : f32
    %367 = arith.select %366, %cst_178, %cst_179 : f32
    %368 = arith.index_cast %365 : i32 to index
    %c0_180 = arith.constant 0 : index
    %c0_181 = arith.constant 0 : index
    %369 = vector.load %arg3[%368, %c0_180, %c0_181] : memref<128x1x32xf32, #tpu.memory_space<vmem>>, vector<1x1x32xf32>
    %370 = vector.shape_cast %369 : vector<1x1x32xf32> to vector<1x32xf32>
    %371 = vector.broadcast %367 : f32 to vector<1x32xf32>
    %372 = arith.mulf %371, %370 : vector<1x32xf32>
    %373 = arith.addf %363, %372 : vector<1x32xf32>
    %374 = arith.index_cast %arg0 : i32 to index
    %c32 = arith.constant 32 : index
    %375 = memref.load %arg1[%374, %c32] : memref<4x40xi32, #tpu.memory_space<smem>>
    %c2_i32_182 = arith.constant 2 : i32
    %376 = arith.cmpi sgt, %349, %c2_i32_182 : i32
    %cst_183 = arith.constant 1.000000e+00 : f32
    %cst_184 = arith.constant 0.000000e+00 : f32
    %377 = arith.select %376, %cst_183, %cst_184 : f32
    %378 = arith.index_cast %375 : i32 to index
    %c0_185 = arith.constant 0 : index
    %c0_186 = arith.constant 0 : index
    %379 = vector.load %arg3[%378, %c0_185, %c0_186] : memref<128x1x32xf32, #tpu.memory_space<vmem>>, vector<1x1x32xf32>
    %380 = vector.shape_cast %379 : vector<1x1x32xf32> to vector<1x32xf32>
    %381 = vector.broadcast %377 : f32 to vector<1x32xf32>
    %382 = arith.mulf %381, %380 : vector<1x32xf32>
    %383 = arith.addf %373, %382 : vector<1x32xf32>
    %384 = arith.index_cast %arg0 : i32 to index
    %c33 = arith.constant 33 : index
    %385 = memref.load %arg1[%384, %c33] : memref<4x40xi32, #tpu.memory_space<smem>>
    %c3_i32_187 = arith.constant 3 : i32
    %386 = arith.cmpi sgt, %349, %c3_i32_187 : i32
    %cst_188 = arith.constant 1.000000e+00 : f32
    %cst_189 = arith.constant 0.000000e+00 : f32
    %387 = arith.select %386, %cst_188, %cst_189 : f32
    %388 = arith.index_cast %385 : i32 to index
    %c0_190 = arith.constant 0 : index
    %c0_191 = arith.constant 0 : index
    %389 = vector.load %arg3[%388, %c0_190, %c0_191] : memref<128x1x32xf32, #tpu.memory_space<vmem>>, vector<1x1x32xf32>
    %390 = vector.shape_cast %389 : vector<1x1x32xf32> to vector<1x32xf32>
    %391 = vector.broadcast %387 : f32 to vector<1x32xf32>
    %392 = arith.mulf %391, %390 : vector<1x32xf32>
    %393 = arith.addf %383, %392 : vector<1x32xf32>
    %394 = arith.index_cast %arg0 : i32 to index
    %c34 = arith.constant 34 : index
    %395 = memref.load %arg1[%394, %c34] : memref<4x40xi32, #tpu.memory_space<smem>>
    %c4_i32_192 = arith.constant 4 : i32
    %396 = arith.cmpi sgt, %349, %c4_i32_192 : i32
    %cst_193 = arith.constant 1.000000e+00 : f32
    %cst_194 = arith.constant 0.000000e+00 : f32
    %397 = arith.select %396, %cst_193, %cst_194 : f32
    %398 = arith.index_cast %395 : i32 to index
    %c0_195 = arith.constant 0 : index
    %c0_196 = arith.constant 0 : index
    %399 = vector.load %arg3[%398, %c0_195, %c0_196] : memref<128x1x32xf32, #tpu.memory_space<vmem>>, vector<1x1x32xf32>
    %400 = vector.shape_cast %399 : vector<1x1x32xf32> to vector<1x32xf32>
    %401 = vector.broadcast %397 : f32 to vector<1x32xf32>
    %402 = arith.mulf %401, %400 : vector<1x32xf32>
    %403 = arith.addf %393, %402 : vector<1x32xf32>
    %404 = vector.broadcast %352 : f32 to vector<1x32xf32>
    %405 = arith.mulf %403, %404 : vector<1x32xf32>
    %406 = arith.index_cast %arg0 : i32 to index
    %c7_197 = arith.constant 7 : index
    %407 = memref.load %arg2[%406, %c7_197] : memref<4x8xi32, #tpu.memory_space<smem>>
    %c1_i32_198 = arith.constant 1 : i32
    %408 = arith.maxsi %407, %c1_i32_198 : i32
    %409 = arith.sitofp %408 : i32 to f32
    %cst_199 = arith.constant 1.000000e+00 : f32
    %410 = arith.divf %cst_199, %409 : f32
    %cst_200 = arith.constant 0.000000e+00 : f32
    %411 = vector.broadcast %cst_200 : f32 to vector<1x32xf32>
    %412 = arith.index_cast %arg0 : i32 to index
    %c35 = arith.constant 35 : index
    %413 = memref.load %arg1[%412, %c35] : memref<4x40xi32, #tpu.memory_space<smem>>
    %c0_i32_201 = arith.constant 0 : i32
    %414 = arith.cmpi sgt, %407, %c0_i32_201 : i32
    %cst_202 = arith.constant 1.000000e+00 : f32
    %cst_203 = arith.constant 0.000000e+00 : f32
    %415 = arith.select %414, %cst_202, %cst_203 : f32
    %416 = arith.index_cast %413 : i32 to index
    %c0_204 = arith.constant 0 : index
    %c0_205 = arith.constant 0 : index
    %417 = vector.load %arg3[%416, %c0_204, %c0_205] : memref<128x1x32xf32, #tpu.memory_space<vmem>>, vector<1x1x32xf32>
    %418 = vector.shape_cast %417 : vector<1x1x32xf32> to vector<1x32xf32>
    %419 = vector.broadcast %415 : f32 to vector<1x32xf32>
    %420 = arith.mulf %419, %418 : vector<1x32xf32>
    %421 = arith.addf %411, %420 : vector<1x32xf32>
    %422 = arith.index_cast %arg0 : i32 to index
    %c36 = arith.constant 36 : index
    %423 = memref.load %arg1[%422, %c36] : memref<4x40xi32, #tpu.memory_space<smem>>
    %c1_i32_206 = arith.constant 1 : i32
    %424 = arith.cmpi sgt, %407, %c1_i32_206 : i32
    %cst_207 = arith.constant 1.000000e+00 : f32
    %cst_208 = arith.constant 0.000000e+00 : f32
    %425 = arith.select %424, %cst_207, %cst_208 : f32
    %426 = arith.index_cast %423 : i32 to index
    %c0_209 = arith.constant 0 : index
    %c0_210 = arith.constant 0 : index
    %427 = vector.load %arg3[%426, %c0_209, %c0_210] : memref<128x1x32xf32, #tpu.memory_space<vmem>>, vector<1x1x32xf32>
    %428 = vector.shape_cast %427 : vector<1x1x32xf32> to vector<1x32xf32>
    %429 = vector.broadcast %425 : f32 to vector<1x32xf32>
    %430 = arith.mulf %429, %428 : vector<1x32xf32>
    %431 = arith.addf %421, %430 : vector<1x32xf32>
    %432 = arith.index_cast %arg0 : i32 to index
    %c37 = arith.constant 37 : index
    %433 = memref.load %arg1[%432, %c37] : memref<4x40xi32, #tpu.memory_space<smem>>
    %c2_i32_211 = arith.constant 2 : i32
    %434 = arith.cmpi sgt, %407, %c2_i32_211 : i32
    %cst_212 = arith.constant 1.000000e+00 : f32
    %cst_213 = arith.constant 0.000000e+00 : f32
    %435 = arith.select %434, %cst_212, %cst_213 : f32
    %436 = arith.index_cast %433 : i32 to index
    %c0_214 = arith.constant 0 : index
    %c0_215 = arith.constant 0 : index
    %437 = vector.load %arg3[%436, %c0_214, %c0_215] : memref<128x1x32xf32, #tpu.memory_space<vmem>>, vector<1x1x32xf32>
    %438 = vector.shape_cast %437 : vector<1x1x32xf32> to vector<1x32xf32>
    %439 = vector.broadcast %435 : f32 to vector<1x32xf32>
    %440 = arith.mulf %439, %438 : vector<1x32xf32>
    %441 = arith.addf %431, %440 : vector<1x32xf32>
    %442 = arith.index_cast %arg0 : i32 to index
    %c38 = arith.constant 38 : index
    %443 = memref.load %arg1[%442, %c38] : memref<4x40xi32, #tpu.memory_space<smem>>
    %c3_i32_216 = arith.constant 3 : i32
    %444 = arith.cmpi sgt, %407, %c3_i32_216 : i32
    %cst_217 = arith.constant 1.000000e+00 : f32
    %cst_218 = arith.constant 0.000000e+00 : f32
    %445 = arith.select %444, %cst_217, %cst_218 : f32
    %446 = arith.index_cast %443 : i32 to index
    %c0_219 = arith.constant 0 : index
    %c0_220 = arith.constant 0 : index
    %447 = vector.load %arg3[%446, %c0_219, %c0_220] : memref<128x1x32xf32, #tpu.memory_space<vmem>>, vector<1x1x32xf32>
    %448 = vector.shape_cast %447 : vector<1x1x32xf32> to vector<1x32xf32>
    %449 = vector.broadcast %445 : f32 to vector<1x32xf32>
    %450 = arith.mulf %449, %448 : vector<1x32xf32>
    %451 = arith.addf %441, %450 : vector<1x32xf32>
    %452 = arith.index_cast %arg0 : i32 to index
    %c39 = arith.constant 39 : index
    %453 = memref.load %arg1[%452, %c39] : memref<4x40xi32, #tpu.memory_space<smem>>
    %c4_i32_221 = arith.constant 4 : i32
    %454 = arith.cmpi sgt, %407, %c4_i32_221 : i32
    %cst_222 = arith.constant 1.000000e+00 : f32
    %cst_223 = arith.constant 0.000000e+00 : f32
    %455 = arith.select %454, %cst_222, %cst_223 : f32
    %456 = arith.index_cast %453 : i32 to index
    %c0_224 = arith.constant 0 : index
    %c0_225 = arith.constant 0 : index
    %457 = vector.load %arg3[%456, %c0_224, %c0_225] : memref<128x1x32xf32, #tpu.memory_space<vmem>>, vector<1x1x32xf32>
    %458 = vector.shape_cast %457 : vector<1x1x32xf32> to vector<1x32xf32>
    %459 = vector.broadcast %455 : f32 to vector<1x32xf32>
    %460 = arith.mulf %459, %458 : vector<1x32xf32>
    %461 = arith.addf %451, %460 : vector<1x32xf32>
    %462 = vector.broadcast %410 : f32 to vector<1x32xf32>
    %463 = arith.mulf %461, %462 : vector<1x32xf32>
    %464 = tpu.concatenate %57, %115, %173, %231, %289, %347, %405, %463 in 0 : vector<1x32xf32>, vector<1x32xf32>, vector<1x32xf32>, vector<1x32xf32>, vector<1x32xf32>, vector<1x32xf32>, vector<1x32xf32>, vector<1x32xf32> -> vector<8x32xf32>
    %c0_226 = arith.constant 0 : index
    %c0_227 = arith.constant 0 : index
    %c0_228 = arith.constant 0 : index
    %465 = vector.load %arg4[%c0_226, %c0_227, %c0_228] : memref<1x8x32xf32, #tpu.memory_space<vmem>>, vector<1x8x32xf32>
    %466 = vector.shape_cast %465 : vector<1x8x32xf32> to vector<8x32xf32>
    %467 = vector.shape_cast %464 : vector<8x32xf32> to vector<1x8x32xf32>
    tpu.vector_store %arg4[%c0_226, %c0_227, %c0_228], %467 {strides = array<i32>} : memref<1x8x32xf32, #tpu.memory_space<vmem>>, vector<1x8x32xf32>,
    return
  }
  func.func @transform_0(%arg0: i32, %arg1: memref<4x40xi32, #tpu.memory_space<smem>>, %arg2: memref<4x8xi32, #tpu.memory_space<smem>>) -> (i32, i32, i32) {
    %c0_i32 = arith.constant 0 : i32
    %c0_i32_0 = arith.constant 0 : i32
    %c0_i32_1 = arith.constant 0 : i32
    %c0_i32_2 = arith.constant 0 : i32
    return %c0_i32, %c0_i32_0, %c0_i32_1 : i32, i32, i32
  }
  func.func @transform_1(%arg0: i32, %arg1: memref<4x40xi32, #tpu.memory_space<smem>>, %arg2: memref<4x8xi32, #tpu.memory_space<smem>>) -> (i32, i32, i32) {
    %c0_i32 = arith.constant 0 : i32
    %c0_i32_0 = arith.constant 0 : i32
    %c0_i32_1 = arith.constant 0 : i32
    return %arg0, %c0_i32, %c0_i32_0 : i32, i32, i32
  }
}

</mosaic_0001>

<llo_original>
// kernel: pooled_segment_embed.1
$region0: #{pooled_segment_embed.1}
  #allocation0 [shape = 'u32[]', space=smem, size = 0x4, offset = 0x4, fixed_abs, tag = 'smem constant byte address 0x4 - core index']
  #allocation1 [shape = 'u32[144,128]{1,0:T(1,128)}', space=vmem, size = 0x12000, scoped, tag = 'internal scratch']
  #allocation2 [shape = 's32[1]{0}', space=sflag, size = 0x4, scoped, tag = 'scoped memory for pooled_segment_embed.1']
  #allocation3 [shape = 'u8[2048]{0}', space=smem, size = 0x800, scoped, tag = 'prefetched SMEM operand 0']
  #allocation4 [shape = 'u8[2048]{0}', space=smem, size = 0x800, scoped, tag = 'prefetched SMEM operand 1']
  %s0 = inlined_call_operand.vmem [shape: s32[4,40], index: 0, kind: input, shape index: {}]
  %s1 = inlined_call_operand.vmem [shape: s32[4,8], index: 1, kind: input, shape index: {}]
  %s2 = inlined_call_operand.vmem [shape: f32[128,1,32], index: 2, kind: input, shape index: {}]
  %s3 = inlined_call_operand.hbm [shape: f32[4,8,32], index: 3, kind: output, shape index: {}]
  %s4 = sld [smem:[#allocation0]]
  $region37: #{pooled_segment_embed.1} parent=0
    _
  %s6 = ssub.s32 1, %s4
  %s7 = scalar_select 0, %s6, %s4
  %s8 = sshll.u32 %s0, 4
  %s9 = int_to_ptr.vmem [resolvable:$true] %s8
  %11 = dma.vmem_to_smem %s9, 64, [#allocation3], [#allocation2]
  %s12 = sshll.u32 %s1, 4
  %s13 = int_to_ptr.vmem [resolvable:$true] %s12
  %15 = dma.vmem_to_smem %s13, 64, [#allocation4], [#allocation2]
  %16 = dma.done [#allocation2], 128
  %17 = sfence
  $region1: #{pooled_segment_embed.1} parent=0
    #allocation5 [shape = 'u8[8192]{0}', space=vmem, size = 0x2000, scoped, tag = 'output window, operand 0']
    #allocation6 [shape = 's32[2]{0}', space=sflag, size = 0x8, scoped, tag = 'scoped memory for pooled_segment_embed.1']
    %18 = vsyncpa [#allocation6], 0
    %s19 = scalar_lea.sflag [#allocation6], 1
    %20 = vsyncpa %s19, 0
    loop: start=0, step=1, limit=6
    $region2: #{pooled_segment_embed.1} parent=1 // loop_pre_header
      _
    $region3: #{pooled_segment_embed.1} parent=1 // loop_header
      %s22 = sphi 0, %s26
      %p23 = scmp.ge.s32.totalorder %s22, 6
      %s30 = sphi 0, %s30
      %s32 = sphi 0, %s30
      %s33 = sphi 0, %s32
      %s47 = sphi 0, %s33
      %s53 = sphi 0, %s55
      %s56 = sphi 0, %s53
      %s57 = sphi 0, %s56
      %s73 = sphi 0, %s57
    $region4: #{pooled_segment_embed.1} parent=1 // loop_header_branch
      %25 = sbr.rel (%p23) target = $region8
    $region5: #{pooled_segment_embed.1} parent=1 // loop_body
      %s27 = ssub.s32 %s22, 1
      %s28 = ssub.s32 %s22, 2
      %s29 = sadd.s32 %s22, 1
      %s31 = sadd.s32 %s30, 1
      %p34 = scmp.eq.s32.totalorder %s22, 3
      %p35 = scmp.ne.s32.totalorder %s30, %s32
      %p36 = scmp.eq.s32.totalorder %s22, 0
      %p37 = por %p35, %p36
      %p38 = scmp.ne.s32.totalorder %s30, %s32
      %p39 = scmp.eq.s32.totalorder %s27, 3
      %p40 = por %p38, %p39
      %p41 = scmp.ne.s32.totalorder %s32, %s33
      %p42 = scmp.eq.s32.totalorder %s27, 0
      %p43 = por %p41, %p42
      %p44 = scmp.ne.s32.totalorder %s32, %s33
      %p45 = scmp.eq.s32.totalorder %s28, 3
      %p46 = por %p44, %p45
      %p48 = scmp.ne.s32.totalorder %s33, %s47
      %p49 = scmp.eq.s32.totalorder %s28, 0
      %p50 = por %p48, %p49
      %s51 = ssub.s32 %s22, %s29
      %p52 = scmp.eq.s32.totalorder %s51, 0
      %s54 = sadd.s32 %s53, 1
      %s55 = scalar_select %p52, %s53, %s54
      %p58 = pneg %p52
      %p59 = scmp.eq.s32.totalorder %s22, 3
      %p60 = por %p58, %p59
      %p61 = scmp.ne.s32.totalorder %s53, %s56
      %p62 = scmp.eq.s32.totalorder %s22, 0
      %p63 = por %p61, %p62
      %p64 = scmp.ne.s32.totalorder %s53, %s56
      %p65 = scmp.eq.s32.totalorder %s27, 3
      %p66 = por %p64, %p65
      %p67 = scmp.ne.s32.totalorder %s56, %s57
      %p68 = scmp.eq.s32.totalorder %s27, 0
      %p69 = por %p67, %p68
      %p70 = scmp.ne.s32.totalorder %s56, %s57
      %p71 = scmp.eq.s32.totalorder %s28, 3
      %p72 = por %p70, %p71
      %p74 = scmp.ne.s32.totalorder %s57, %s73
      %p75 = scmp.eq.s32.totalorder %s28, 0
      %p76 = por %p74, %p75
      %p77 = scmp.le.s32.totalorder 1, %s22
      %p78 = scmp.lt.s32.totalorder %s22, 5
      %p79 = pnand %p77, %p78
      %p80 = pneg %p79
      // Predicated region
      $region9: #{pooled_segment_embed.1} parent=5 // pred_check
        _
      $region10: #{pooled_segment_embed.1} parent=5 // pred_check_branch
        %82 = sbr.rel (%p79) target = $region12
      $region11: #{pooled_segment_embed.1} parent=5 // pred_region
        %s83 = ssub.s32 %s22, 1
        // Predicated region
        $region13: #{pooled_segment_embed.1} parent=11 // pred_check
          %p84 = pneg %p43
        $region14: #{pooled_segment_embed.1} parent=11 // pred_check_branch
          %86 = sbr.rel (%p84) target = $region16
        $region15: #{pooled_segment_embed.1} parent=11 // pred_region
          _
        $region16: #{pooled_segment_embed.1} parent=11 // pred_fallthru
          _
      $region12: #{pooled_segment_embed.1} parent=5 // pred_fallthru
        _
      %p87 = scmp.lt.s32.totalorder %s22, 4
      // Predicated region
      $region17: #{pooled_segment_embed.1} parent=5 // pred_check
        %p88 = pneg %p87
      $region18: #{pooled_segment_embed.1} parent=5 // pred_check_branch
        %90 = sbr.rel (%p88) target = $region20
      $region19: #{pooled_segment_embed.1} parent=5 // pred_region
        _
      $region20: #{pooled_segment_embed.1} parent=5 // pred_fallthru
        _
      %p91 = scmp.le.s32.totalorder 1, %s22
      %p92 = scmp.lt.s32.totalorder %s22, 5
      %p93 = pnand %p91, %p92
      %p94 = pneg %p93
      // Predicated region
      $region21: #{pooled_segment_embed.1} parent=5 // pred_check
        _
      $region22: #{pooled_segment_embed.1} parent=5 // pred_check_branch
        %96 = sbr.rel (%p93) target = $region24
      $region23: #{pooled_segment_embed.1} parent=5 // pred_region
        %s97 = ssub.s32 %s22, 1
        %p98 = pneg %p43
        %p99 = pneg %p40
        %p100 = pneg %p69
        %p101 = pneg %p66
        %s102 = sand.u32 %s56, 1
        %s103 = scalar_lea.sflag [#allocation6], %s102
        %s104 = sand.u32 %s56, 1
        %s105 = smul.addr %s104, 8
        %s106 = scalar_lea.vmem [#allocation5], %s105
        %s107 = smul.u32 %s27, 128
        %s108 = sld [smem:[#allocation4 + %s107]]
        %p109 = scmp.gt.s32.totalorder %s108, 1
        %s110 = scalar_select %p109, %s108, 1
        %s111 = scvt.s32.f32 %s110
        %v112 = vstv %s111
        %v113 = vrcp.pop %v112
        %s114 = vtos %v113
        %s115 = sld [smem:[#allocation3 + %s107]]
        %p116 = scmp.gt.s32.totalorder %s108, 0
        %s117 = scalar_select %p116, 1.0, 0.0
        %s118 = scalar_lea.vmem %s2, %s115
        %v119 = vld [vmem:[%s118] sm:$0x1]
        %v120 = vstv %s117
        %v121 = vmul.f32 %v120, %v119
        %v122 = vadd.f32 %v121, 0.0
        %s123 = sadd.s32 %s107, 1
        %s124 = sld [smem:[#allocation3 + %s123]]
        %p125 = scmp.gt.s32.totalorder %s108, 1
        %s126 = scalar_select %p125, 1.0, 0.0
        %s127 = scalar_lea.vmem %s2, %s124
        %v128 = vld [vmem:[%s127] sm:$0x1]
        %v129 = vstv %s126
        %v130 = vmul.f32 %v129, %v128
        %v131 = vadd.f32 %v122, %v130
        %s132 = sadd.s32 %s107, 2
        %s133 = sld [smem:[#allocation3 + %s132]]
        %p134 = scmp.gt.s32.totalorder %s108, 2
        %s135 = scalar_select %p134, 1.0, 0.0
        %s136 = scalar_lea.vmem %s2, %s133
        %v137 = vld [vmem:[%s136] sm:$0x1]
        %v138 = vstv %s135
        %v139 = vmul.f32 %v138, %v137
        %v140 = vadd.f32 %v131, %v139
        %s141 = sadd.s32 %s107, 3
        %s142 = sld [smem:[#allocation3 + %s141]]
        %p143 = scmp.gt.s32.totalorder %s108, 3
        %s144 = scalar_select %p143, 1.0, 0.0
        %s145 = scalar_lea.vmem %s2, %s142
        %v146 = vld [vmem:[%s145] sm:$0x1]
        %v147 = vstv %s144
        %v148 = vmul.f32 %v147, %v146
        %v149 = vadd.f32 %v140, %v148
        %s150 = sadd.s32 %s107, 4
        %s151 = sld [smem:[#allocation3 + %s150]]
        %p152 = scmp.gt.s32.totalorder %s108, 4
        %s153 = scalar_select %p152, 1.0, 0.0
        %s154 = scalar_lea.vmem %s2, %s151
        %v155 = vld [vmem:[%s154] sm:$0x1]
        %v156 = vstv %s153
        %v157 = vmul.f32 %v156, %v155
        %v158 = vadd.f32 %v149, %v157
        %v159 = vstv %s114
        %v160 = vmul.f32 %v158, %v159
        %s161 = sld [smem:[#allocation4 + %s123]]
        %p162 = scmp.gt.s32.totalorder %s161, 1
        %s163 = scalar_select %p162, %s161, 1
        %s164 = scvt.s32.f32 %s163
        %v165 = vstv %s164
        %v166 = vrcp.pop %v165
        %s167 = vtos %v166
        %s168 = sadd.s32 %s107, 5
        %s169 = sld [smem:[#allocation3 + %s168]]
        %p170 = scmp.gt.s32.totalorder %s161, 0
        %s171 = scalar_select %p170, 1.0, 0.0
        %s172 = scalar_lea.vmem %s2, %s169
        %v173 = vld [vmem:[%s172] sm:$0x1]
        %v174 = vstv %s171
        %v175 = vmul.f32 %v174, %v173
        %v176 = vadd.f32 %v175, 0.0
        %s177 = sadd.s32 %s107, 6
        %s178 = sld [smem:[#allocation3 + %s177]]
        %p179 = scmp.gt.s32.totalorder %s161, 1
        %s180 = scalar_select %p179, 1.0, 0.0
        %s181 = scalar_lea.vmem %s2, %s178
        %v182 = vld [vmem:[%s181] sm:$0x1]
        %v183 = vstv %s180
        %v184 = vmul.f32 %v183, %v182
        %v185 = vadd.f32 %v176, %v184
        %s186 = sadd.s32 %s107, 7
        %s187 = sld [smem:[#allocation3 + %s186]]
        %p188 = scmp.gt.s32.totalorder %s161, 2
        %s189 = scalar_select %p188, 1.0, 0.0
        %s190 = scalar_lea.vmem %s2, %s187
        %v191 = vld [vmem:[%s190] sm:$0x1]
        %v192 = vstv %s189
        %v193 = vmul.f32 %v192, %v191
        %v194 = vadd.f32 %v185, %v193
        %s195 = sadd.s32 %s107, 8
        %s196 = sld [smem:[#allocation3 + %s195]]
        %p197 = scmp.gt.s32.totalorder %s161, 3
        %s198 = scalar_select %p197, 1.0, 0.0
        %s199 = scalar_lea.vmem %s2, %s196
        %v200 = vld [vmem:[%s199] sm:$0x1]
        %v201 = vstv %s198
        %v202 = vmul.f32 %v201, %v200
        %v203 = vadd.f32 %v194, %v202
        %s204 = sadd.s32 %s107, 9
        %s205 = sld [smem:[#allocation3 + %s204]]
        %p206 = scmp.gt.s32.totalorder %s161, 4
        %s207 = scalar_select %p206, 1.0, 0.0
        %s208 = scalar_lea.vmem %s2, %s205
        %v209 = vld [vmem:[%s208] sm:$0x1]
        %v210 = vstv %s207
        %v211 = vmul.f32 %v210, %v209
        %v212 = vadd.f32 %v203, %v211
        %v213 = vstv %s167
        %v214 = vmul.f32 %v212, %v213
        %s215 = sld [smem:[#allocation4 + %s132]]
        %p216 = scmp.gt.s32.totalorder %s215, 1
        %s217 = scalar_select %p216, %s215, 1
        %s218 = scvt.s32.f32 %s217
        %v219 = vstv %s218
        %v220 = vrcp.pop %v219
        %s221 = vtos %v220
        %s222 = sadd.s32 %s107, 10
        %s223 = sld [smem:[#allocation3 + %s222]]
        %p224 = scmp.gt.s32.totalorder %s215, 0
        %s225 = scalar_select %p224, 1.0, 0.0
        %s226 = scalar_lea.vmem %s2, %s223
        %v227 = vld [vmem:[%s226] sm:$0x1]
        %v228 = vstv %s225
        %v229 = vmul.f32 %v228, %v227
        %v230 = vadd.f32 %v229, 0.0
        %s231 = sadd.s32 %s107, 11
        %s232 = sld [smem:[#allocation3 + %s231]]
        %p233 = scmp.gt.s32.totalorder %s215, 1
        %s234 = scalar_select %p233, 1.0, 0.0
        %s235 = scalar_lea.vmem %s2, %s232
        %v236 = vld [vmem:[%s235] sm:$0x1]
        %v237 = vstv %s234
        %v238 = vmul.f32 %v237, %v236
        %v239 = vadd.f32 %v230, %v238
        %s240 = sadd.s32 %s107, 12
        %s241 = sld [smem:[#allocation3 + %s240]]
        %p242 = scmp.gt.s32.totalorder %s215, 2
        %s243 = scalar_select %p242, 1.0, 0.0
        %s244 = scalar_lea.vmem %s2, %s241
        %v245 = vld [vmem:[%s244] sm:$0x1]
        %v246 = vstv %s243
        %v247 = vmul.f32 %v246, %v245
        %v248 = vadd.f32 %v239, %v247
        %s249 = sadd.s32 %s107, 13
        %s250 = sld [smem:[#allocation3 + %s249]]
        %p251 = scmp.gt.s32.totalorder %s215, 3
        %s252 = scalar_select %p251, 1.0, 0.0
        %s253 = scalar_lea.vmem %s2, %s250
        %v254 = vld [vmem:[%s253] sm:$0x1]
        %v255 = vstv %s252
        %v256 = vmul.f32 %v255, %v254
        %v257 = vadd.f32 %v248, %v256
        %s258 = sadd.s32 %s107, 14
        %s259 = sld [smem:[#allocation3 + %s258]]
        %p260 = scmp.gt.s32.totalorder %s215, 4
        %s261 = scalar_select %p260, 1.0, 0.0
        %s262 = scalar_lea.vmem %s2, %s259
        %v263 = vld [vmem:[%s262] sm:$0x1]
        %v264 = vstv %s261
        %v265 = vmul.f32 %v264, %v263
        %v266 = vadd.f32 %v257, %v265
        %v267 = vstv %s221
        %v268 = vmul.f32 %v266, %v267
        %s269 = sld [smem:[#allocation4 + %s141]]
        %p270 = scmp.gt.s32.totalorder %s269, 1
        %s271 = scalar_select %p270, %s269, 1
        %s272 = scvt.s32.f32 %s271
        %v273 = vstv %s272
        %v274 = vrcp.pop %v273
        %s275 = vtos %v274
        %s276 = sadd.s32 %s107, 15
        %s277 = sld [smem:[#allocation3 + %s276]]
        %p278 = scmp.gt.s32.totalorder %s269, 0
        %s279 = scalar_select %p278, 1.0, 0.0
        %s280 = scalar_lea.vmem %s2, %s277
        %v281 = vld [vmem:[%s280] sm:$0x1]
        %v282 = vstv %s279
        %v283 = vmul.f32 %v282, %v281
        %v284 = vadd.f32 %v283, 0.0
        %s285 = sadd.s32 %s107, 16
        %s286 = sld [smem:[#allocation3 + %s285]]
        %p287 = scmp.gt.s32.totalorder %s269, 1
        %s288 = scalar_select %p287, 1.0, 0.0
        %s289 = scalar_lea.vmem %s2, %s286
        %v290 = vld [vmem:[%s289] sm:$0x1]
        %v291 = vstv %s288
        %v292 = vmul.f32 %v291, %v290
        %v293 = vadd.f32 %v284, %v292
        %s294 = sadd.s32 %s107, 17
        %s295 = sld [smem:[#allocation3 + %s294]]
        %p296 = scmp.gt.s32.totalorder %s269, 2
        %s297 = scalar_select %p296, 1.0, 0.0
        %s298 = scalar_lea.vmem %s2, %s295
        %v299 = vld [vmem:[%s298] sm:$0x1]
        %v300 = vstv %s297
        %v301 = vmul.f32 %v300, %v299
        %v302 = vadd.f32 %v293, %v301
        %s303 = sadd.s32 %s107, 18
        %s304 = sld [smem:[#allocation3 + %s303]]
        %p305 = scmp.gt.s32.totalorder %s269, 3
        %s306 = scalar_select %p305, 1.0, 0.0
        %s307 = scalar_lea.vmem %s2, %s304
        %v308 = vld [vmem:[%s307] sm:$0x1]
        %v309 = vstv %s306
        %v310 = vmul.f32 %v309, %v308
        %v311 = vadd.f32 %v302, %v310
        %s312 = sadd.s32 %s107, 19
        %s313 = sld [smem:[#allocation3 + %s312]]
        %p314 = scmp.gt.s32.totalorder %s269, 4
        %s315 = scalar_select %p314, 1.0, 0.0
        %s316 = scalar_lea.vmem %s2, %s313
        %v317 = vld [vmem:[%s316] sm:$0x1]
        %v318 = vstv %s315
        %v319 = vmul.f32 %v318, %v317
        %v320 = vadd.f32 %v311, %v319
        %v321 = vstv %s275
        %v322 = vmul.f32 %v320, %v321
        %s323 = sld [smem:[#allocation4 + %s150]]
        %p324 = scmp.gt.s32.totalorder %s323, 1
        %s325 = scalar_select %p324, %s323, 1
        %s326 = scvt.s32.f32 %s325
        %v327 = vstv %s326
        %v328 = vrcp.pop %v327
        %s329 = vtos %v328
        %s330 = sadd.s32 %s107, 20
        %s331 = sld [smem:[#allocation3 + %s330]]
        %p332 = scmp.gt.s32.totalorder %s323, 0
        %s333 = scalar_select %p332, 1.0, 0.0
        %s334 = scalar_lea.vmem %s2, %s331
        %v335 = vld [vmem:[%s334] sm:$0x1]
        %v336 = vstv %s333
        %v337 = vmul.f32 %v336, %v335
        %v338 = vadd.f32 %v337, 0.0
        %s339 = sadd.s32 %s107, 21
        %s340 = sld [smem:[#allocation3 + %s339]]
        %p341 = scmp.gt.s32.totalorder %s323, 1
        %s342 = scalar_select %p341, 1.0, 0.0
        %s343 = scalar_lea.vmem %s2, %s340
        %v344 = vld [vmem:[%s343] sm:$0x1]
        %v345 = vstv %s342
        %v346 = vmul.f32 %v345, %v344
        %v347 = vadd.f32 %v338, %v346
        %s348 = sadd.s32 %s107, 22
        %s349 = sld [smem:[#allocation3 + %s348]]
        %p350 = scmp.gt.s32.totalorder %s323, 2
        %s351 = scalar_select %p350, 1.0, 0.0
        %s352 = scalar_lea.vmem %s2, %s349
        %v353 = vld [vmem:[%s352] sm:$0x1]
        %v354 = vstv %s351
        %v355 = vmul.f32 %v354, %v353
        %v356 = vadd.f32 %v347, %v355
        %s357 = sadd.s32 %s107, 23
        %s358 = sld [smem:[#allocation3 + %s357]]
        %p359 = scmp.gt.s32.totalorder %s323, 3
        %s360 = scalar_select %p359, 1.0, 0.0
        %s361 = scalar_lea.vmem %s2, %s358
        %v362 = vld [vmem:[%s361] sm:$0x1]
        %v363 = vstv %s360
        %v364 = vmul.f32 %v363, %v362
        %v365 = vadd.f32 %v356, %v364
        %s366 = sadd.s32 %s107, 24
        %s367 = sld [smem:[#allocation3 + %s366]]
        %p368 = scmp.gt.s32.totalorder %s323, 4
        %s369 = scalar_select %p368, 1.0, 0.0
        %s370 = scalar_lea.vmem %s2, %s367
        %v371 = vld [vmem:[%s370] sm:$0x1]
        %v372 = vstv %s369
        %v373 = vmul.f32 %v372, %v371
        %v374 = vadd.f32 %v365, %v373
        %v375 = vstv %s329
        %v376 = vmul.f32 %v374, %v375
        %s377 = sld [smem:[#allocation4 + %s168]]
        %p378 = scmp.gt.s32.totalorder %s377, 1
        %s379 = scalar_select %p378, %s377, 1
        %s380 = scvt.s32.f32 %s379
        %v381 = vstv %s380
        %v382 = vrcp.pop %v381
        %s383 = vtos %v382
        %s384 = sadd.s32 %s107, 25
        %s385 = sld [smem:[#allocation3 + %s384]]
        %p386 = scmp.gt.s32.totalorder %s377, 0
        %s387 = scalar_select %p386, 1.0, 0.0
        %s388 = scalar_lea.vmem %s2, %s385
        %v389 = vld [vmem:[%s388] sm:$0x1]
        %v390 = vstv %s387
        %v391 = vmul.f32 %v390, %v389
        %v392 = vadd.f32 %v391, 0.0
        %s393 = sadd.s32 %s107, 26
        %s394 = sld [smem:[#allocation3 + %s393]]
        %p395 = scmp.gt.s32.totalorder %s377, 1
        %s396 = scalar_select %p395, 1.0, 0.0
        %s397 = scalar_lea.vmem %s2, %s394
        %v398 = vld [vmem:[%s397] sm:$0x1]
        %v399 = vstv %s396
        %v400 = vmul.f32 %v399, %v398
        %v401 = vadd.f32 %v392, %v400
        %s402 = sadd.s32 %s107, 27
        %s403 = sld [smem:[#allocation3 + %s402]]
        %p404 = scmp.gt.s32.totalorder %s377, 2
        %s405 = scalar_select %p404, 1.0, 0.0
        %s406 = scalar_lea.vmem %s2, %s403
        %v407 = vld [vmem:[%s406] sm:$0x1]
        %v408 = vstv %s405
        %v409 = vmul.f32 %v408, %v407
        %v410 = vadd.f32 %v401, %v409
        %s411 = sadd.s32 %s107, 28
        %s412 = sld [smem:[#allocation3 + %s411]]
        %p413 = scmp.gt.s32.totalorder %s377, 3
        %s414 = scalar_select %p413, 1.0, 0.0
        %s415 = scalar_lea.vmem %s2, %s412
        %v416 = vld [vmem:[%s415] sm:$0x1]
        %v417 = vstv %s414
        %v418 = vmul.f32 %v417, %v416
        %v419 = vadd.f32 %v410, %v418
        %s420 = sadd.s32 %s107, 29
        %s421 = sld [smem:[#allocation3 + %s420]]
        %p422 = scmp.gt.s32.totalorder %s377, 4
        %s423 = scalar_select %p422, 1.0, 0.0
        %s424 = scalar_lea.vmem %s2, %s421
        %v425 = vld [vmem:[%s424] sm:$0x1]
        %v426 = vstv %s423
        %v427 = vmul.f32 %v426, %v425
        %v428 = vadd.f32 %v419, %v427
        %v429 = vstv %s383
        %v430 = vmul.f32 %v428, %v429
        %s431 = sld [smem:[#allocation4 + %s177]]
        %p432 = scmp.gt.s32.totalorder %s431, 1
        %s433 = scalar_select %p432, %s431, 1
        %s434 = scvt.s32.f32 %s433
        %v435 = vstv %s434
        %v436 = vrcp.pop %v435
        %s437 = vtos %v436
        %s438 = sadd.s32 %s107, 30
        %s439 = sld [smem:[#allocation3 + %s438]]
        %p440 = scmp.gt.s32.totalorder %s431, 0
        %s441 = scalar_select %p440, 1.0, 0.0
        %s442 = scalar_lea.vmem %s2, %s439
        %v443 = vld [vmem:[%s442] sm:$0x1]
        %v444 = vstv %s441
        %v445 = vmul.f32 %v444, %v443
        %v446 = vadd.f32 %v445, 0.0
        %s447 = sadd.s32 %s107, 31
        %s448 = sld [smem:[#allocation3 + %s447]]
        %p449 = scmp.gt.s32.totalorder %s431, 1
        %s450 = scalar_select %p449, 1.0, 0.0
        %s451 = scalar_lea.vmem %s2, %s448
        %v452 = vld [vmem:[%s451] sm:$0x1]
        %v453 = vstv %s450
        %v454 = vmul.f32 %v453, %v452
        %v455 = vadd.f32 %v446, %v454
        %s456 = sadd.s32 %s107, 32
        %s457 = sld [smem:[#allocation3 + %s456]]
        %p458 = scmp.gt.s32.totalorder %s431, 2
        %s459 = scalar_select %p458, 1.0, 0.0
        %s460 = scalar_lea.vmem %s2, %s457
        %v461 = vld [vmem:[%s460] sm:$0x1]
        %v462 = vstv %s459
        %v463 = vmul.f32 %v462, %v461
        %v464 = vadd.f32 %v455, %v463
        %s465 = sadd.s32 %s107, 33
        %s466 = sld [smem:[#allocation3 + %s465]]
        %p467 = scmp.gt.s32.totalorder %s431, 3
        %s468 = scalar_select %p467, 1.0, 0.0
        %s469 = scalar_lea.vmem %s2, %s466
        %v470 = vld [vmem:[%s469] sm:$0x1]
        %v471 = vstv %s468
        %v472 = vmul.f32 %v471, %v470
        %v473 = vadd.f32 %v464, %v472
        %s474 = sadd.s32 %s107, 34
        %s475 = sld [smem:[#allocation3 + %s474]]
        %p476 = scmp.gt.s32.totalorder %s431, 4
        %s477 = scalar_select %p476, 1.0, 0.0
        %s478 = scalar_lea.vmem %s2, %s475
        %v479 = vld [vmem:[%s478] sm:$0x1]
        %v480 = vstv %s477
        %v481 = vmul.f32 %v480, %v479
        %v482 = vadd.f32 %v473, %v481
        %v483 = vstv %s437
        %v484 = vmul.f32 %v482, %v483
        %s485 = sld [smem:[#allocation4 + %s186]]
        %p486 = scmp.gt.s32.totalorder %s485, 1
        %s487 = scalar_select %p486, %s485, 1
        %s488 = scvt.s32.f32 %s487
        %v489 = vstv %s488
        %v490 = vrcp.pop %v489
        %s491 = vtos %v490
        %s492 = sadd.s32 %s107, 35
        %s493 = sld [smem:[#allocation3 + %s492]]
        %p494 = scmp.gt.s32.totalorder %s485, 0
        %s495 = scalar_select %p494, 1.0, 0.0
        %s496 = scalar_lea.vmem %s2, %s493
        %v497 = vld [vmem:[%s496] sm:$0x1]
        %v498 = vstv %s495
        %v499 = vmul.f32 %v498, %v497
        %v500 = vadd.f32 %v499, 0.0
        %s501 = sadd.s32 %s107, 36
        %s502 = sld [smem:[#allocation3 + %s501]]
        %p503 = scmp.gt.s32.totalorder %s485, 1
        %s504 = scalar_select %p503, 1.0, 0.0
        %s505 = scalar_lea.vmem %s2, %s502
        %v506 = vld [vmem:[%s505] sm:$0x1]
        %v507 = vstv %s504
        %v508 = vmul.f32 %v507, %v506
        %v509 = vadd.f32 %v500, %v508
        %s510 = sadd.s32 %s107, 37
        %s511 = sld [smem:[#allocation3 + %s510]]
        %p512 = scmp.gt.s32.totalorder %s485, 2
        %s513 = scalar_select %p512, 1.0, 0.0
        %s514 = scalar_lea.vmem %s2, %s511
        %v515 = vld [vmem:[%s514] sm:$0x1]
        %v516 = vstv %s513
        %v517 = vmul.f32 %v516, %v515
        %v518 = vadd.f32 %v509, %v517
        %s519 = sadd.s32 %s107, 38
        %s520 = sld [smem:[#allocation3 + %s519]]
        %p521 = scmp.gt.s32.totalorder %s485, 3
        %s522 = scalar_select %p521, 1.0, 0.0
        %s523 = scalar_lea.vmem %s2, %s520
        %v524 = vld [vmem:[%s523] sm:$0x1]
        %v525 = vstv %s522
        %v526 = vmul.f32 %v525, %v524
        %v527 = vadd.f32 %v518, %v526
        %s528 = sadd.s32 %s107, 39
        %s529 = sld [smem:[#allocation3 + %s528]]
        %p530 = scmp.gt.s32.totalorder %s485, 4
        %s531 = scalar_select %p530, 1.0, 0.0
        %s532 = scalar_lea.vmem %s2, %s529
        %v533 = vld [vmem:[%s532] sm:$0x1]
        %v534 = vstv %s531
        %v535 = vmul.f32 %v534, %v533
        %v536 = vadd.f32 %v527, %v535
        %v537 = vstv %s491
        %v538 = vmul.f32 %v536, %v537
        %v540 = vlaneseq
        %v541 = vshrl.u32 %v540, 7
        %v542 = vsub.s32 0, %v541
        %v543 = vrot.slane %v214, %v542
        %v546 = vlaneseq
        %v547 = vshrl.u32 %v546, 7
        %v548 = vsub.s32 0, %v547
        %v549 = vrot.slane %v268, %v548
        %v552 = vlaneseq
        %v553 = vshrl.u32 %v552, 7
        %v554 = vsub.s32 0, %v553
        %v555 = vrot.slane %v322, %v554
        %v558 = vlaneseq
        %v559 = vshrl.u32 %v558, 7
        %v560 = vsub.s32 0, %v559
        %v561 = vrot.slane %v376, %v560
        %v564 = vlaneseq
        %v565 = vshrl.u32 %v564, 7
        %v566 = vsub.s32 0, %v565
        %v567 = vrot.slane %v430, %v566
        %v570 = vlaneseq
        %v571 = vshrl.u32 %v570, 7
        %v572 = vsub.s32 0, %v571
        %v573 = vrot.slane %v484, %v572
        %v576 = vlaneseq
        %v577 = vshrl.u32 %v576, 7
        %v578 = vsub.s32 0, %v577
        %v579 = vrot.slane %v538, %v578
        %vm581 = vcmask 1040384
        %v582 = vsel %vm581, %v160, %v543
        %vm583 = vcmask 1041408
        %v584 = vsel %vm583, %v582, %v549
        %vm585 = vcmask 1042432
        %v586 = vsel %vm585, %v584, %v555
        %vm587 = vcmask 1043456
        %v588 = vsel %vm587, %v586, %v561
        %vm589 = vcmask 1044480
        %v590 = vsel %vm589, %v588, %v567
        %vm591 = vcmask 1045504
        %v592 = vsel %vm591, %v590, %v573
        %vm593 = vcmask 1046528
        %v594 = vsel %vm593, %v592, %v579
        %vm595 = vcmask 261120
        %596 = vst.msk [vmem:[%s106] sm:$0xff] %vm595, %v594
        %s597 = sand.u32 %s56, 1
        %s598 = scalar_lea.sflag [#allocation6], %s597
        %s599 = sand.u32 %s56, 1
        %s600 = smul.addr %s599, 8
        %s601 = scalar_lea.vmem [#allocation5], %s600
        // Predicated region
        $region25: #{pooled_segment_embed.1} parent=23 // pred_check
          %p602 = pneg %p66
        $region26: #{pooled_segment_embed.1} parent=23 // pred_check_branch
          %604 = sbr.rel (%p602) target = $region28
        $region27: #{pooled_segment_embed.1} parent=23 // pred_region
          %s606 = ssub.s32 128, 128
          %607 = vsyncadd %s598, %s606
          %s608 = smul.addr %s27, 128
          %s609 = scalar_lea.hbm %s3, %s608
          %s611 = sshll.u32 %s601, 4
          %s612 = int_to_ptr.vmem [resolvable:$true] %s611
          %614 = dma.vmem_to_hbm [thread:$0]  %s612, 128, %s609, %s598
        $region28: #{pooled_segment_embed.1} parent=23 // pred_fallthru
          _
      $region24: #{pooled_segment_embed.1} parent=5 // pred_fallthru
        _
      %p615 = scmp.le.s32.totalorder 2, %s22
      // Predicated region
      $region29: #{pooled_segment_embed.1} parent=5 // pred_check
        %p616 = pneg %p615
      $region30: #{pooled_segment_embed.1} parent=5 // pred_check_branch
        %618 = sbr.rel (%p616) target = $region32
      $region31: #{pooled_segment_embed.1} parent=5 // pred_region
        %s619 = ssub.s32 %s22, 2
        // Predicated region
        $region33: #{pooled_segment_embed.1} parent=31 // pred_check
          %p620 = pneg %p72
        $region34: #{pooled_segment_embed.1} parent=31 // pred_check_branch
          %622 = sbr.rel (%p620) target = $region36
        $region35: #{pooled_segment_embed.1} parent=31 // pred_region
          %s623 = sand.u32 %s57, 1
          %s624 = scalar_lea.sflag [#allocation6], %s623
          %s625 = sand.u32 %s57, 1
          %s626 = smul.addr %s625, 8
          %s627 = scalar_lea.vmem [#allocation5], %s626
          %628 = dma.done %s624, 128
        $region36: #{pooled_segment_embed.1} parent=31 // pred_fallthru
          _
      $region32: #{pooled_segment_embed.1} parent=5 // pred_fallthru
        _
    $region6: #{pooled_segment_embed.1} parent=1 // loop_footer
      %s26 = sadd.s32 1, %s22
    $region7: #{pooled_segment_embed.1} parent=1 // loop_footer_branch
      %21 = sbr.rel target = $region3
    $region8: #{pooled_segment_embed.1} parent=1 // loop_exit
      _
    %629 = vsyncpa [#allocation6], 1
    %s630 = scalar_lea.sflag [#allocation6], 1
    %631 = vsyncpa %s630, 1

</llo_original>
